<compile_context>
chip_gen: v6e
topology: v6e:2x2x1
jax: 0.10.0
libtpu: 0.0.40
codegen_flags: <defaults>
</compile_context>

<pallas_src>
import functools

import jax
import jax.numpy as jnp
from jax import lax
from jax.experimental import pallas as pl
from jax.experimental.pallas import tpu as pltpu

_NEG = -1e30  # finite mask value for padded rows/cols (avoids inf*0 -> NaN paths)


def _clip_loss_kernel(scale_ref, img_ref, txt_hbm, out_ref,
                      txt_vmem, m_col, l_col, s_lse, s_diag,
                      *, n_valid, tb, need_mask):
    i = pl.program_id(0)
    b_pad = txt_vmem.shape[1]

    @pl.when(i == 0)
    def _init():
        # One-time copy of the pre-transposed text into VMEM: single-buffered
        # residency (a constant-index BlockSpec would double-buffer it).
        pltpu.sync_copy(txt_hbm, txt_vmem)
        m_col[...] = jnp.full_like(m_col, -jnp.inf)
        l_col[...] = jnp.zeros_like(l_col)
        s_lse[...] = jnp.zeros_like(s_lse)
        s_diag[...] = jnp.zeros_like(s_diag)

    scale = scale_ref[0]                      # SMEM scalar (1 / temperature)
    img = img_ref[...]                        # [TB, D], native dtype
    txt = txt_vmem[...]                       # [D, B_pad], native dtype

    # MXU matmul with un-scaled inputs, f32 accumulation; scale the f32 logits
    # (one [TB,B] VALU multiply hidden under MXU/EUP).
    logits = lax.dot_general(
        img, txt, (((1,), (0,)), ((), ())),
        preferred_element_type=jnp.float32) * scale          # [TB, B_pad] f32

    row_ids = i * tb + lax.broadcasted_iota(jnp.int32, (tb, b_pad), 0)
    col_ids = lax.broadcasted_iota(jnp.int32, (tb, b_pad), 1)

    if need_mask:
        valid = (row_ids < n_valid) & (col_ids < n_valid)
        logits = jnp.where(valid, logits, _NEG)

    # Shared diagonal (label) term from the f32 logits via an iota mask.
    diag_mask = col_ids == row_ids
    if need_mask:
        diag_mask = diag_mask & (row_ids < n_valid)
    diag = jnp.sum(jnp.where(diag_mask, logits, 0.0),
                   axis=-1, keepdims=True)                    # [TB, 1]
    s_diag[...] += jnp.sum(diag, axis=0, keepdims=True)       # [1, 1]

    # -------- single exp pass shared by both cross-entropy directions --------
    blk_max = jnp.max(logits, axis=-1, keepdims=True)         # [TB, 1]
    blk_max = jnp.max(blk_max, axis=0, keepdims=True)         # [1, 1] block max
    p = jnp.exp(logits - blk_max)                             # [TB, B]  one EUP pass

    # Image direction: exact per-row LSE inside the strip.
    row_lse = jnp.log(jnp.sum(p, axis=-1, keepdims=True)) + blk_max   # [TB, 1]
    if need_mask:
        row_valid = (i * tb + lax.broadcasted_iota(jnp.int32, (tb, 1), 0)) < n_valid
        row_lse = jnp.where(row_valid, row_lse, 0.0)
    s_lse[...] += jnp.sum(row_lse, axis=0, keepdims=True)     # [1, 1]

    # Text direction: online column LSE carried across strips, rescaled with
    # cheap [1, B] exponentials (both exponents are <= 0, no overflow).
    col_sum = jnp.sum(p, axis=0, keepdims=True)               # [1, B]
    m_new = jnp.maximum(m_col[...], blk_max)                  # [1, B]
    l_col[...] = (l_col[...] * jnp.exp(m_col[...] - m_new)
                  + col_sum * jnp.exp(blk_max - m_new))
    m_col[...] = m_new

    @pl.when(i == pl.num_programs(0) - 1)
    def _finalize():
        lse_col = m_col[...] + jnp.log(l_col[...])            # [1, B]
        if need_mask:
            col_valid = lax.broadcasted_iota(jnp.int32, (1, b_pad), 1) < n_valid
            lse_col = jnp.where(col_valid, lse_col, 0.0)
        lse_txt = jnp.sum(lse_col, axis=-1, keepdims=True)    # [1, 1]
        inv_n = jnp.float32(1.0 / n_valid)
        out_ref[...] = 0.5 * ((s_lse[...] - s_diag[...]) +
                              (lse_txt - s_diag[...])) * inv_n


def _vmem_need_bytes(b_pad, d, tb, feat_itemsize):
    text = d * b_pad * feat_itemsize          # resident text, single-buffered
    img = 2 * tb * d * feat_itemsize          # double-buffered image strips
    logits = 3 * tb * b_pad * 4               # f32 logits / exp / select temporaries
    carry = 4 * b_pad * 4 + 4096              # m_col, l_col carries + scalars
    return text + img + logits + carry


def _vmem_capacity_bytes():
    try:
        return int(pltpu.get_tpu_info().vmem_capacity_bytes)
    except Exception:
        return 64 << 20   # v7x floor; safe on every generation


def _pick_row_strip(b, d, feat_itemsize, budget):
    # Prefer the largest MXU-friendly strip whose working set fits the budget.
    for t in (512, 256, 128, 64, 32, 16, 8):
        if t > max(b, 8):
            continue
        b_pad = -(-b // t) * t
        if _vmem_need_bytes(b_pad, d, t, feat_itemsize) <= budget:
            return t
    return 8


def clip_loss(image_features, text_features, temperature,
              row_strip=None, mxu_dtype=None):
    """Forward CLIP loss. image_features/text_features: [B, D] -> f32 scalar.

    mxu_dtype: optionally cast features (e.g. jnp.bfloat16 on the MXU-bound
    v5e) before the kernel; all softmax/LSE math stays in f32 regardless.
    """
    b, d = image_features.shape
    assert text_features.shape == (b, d)
    if mxu_dtype is not None:
        image_features = image_features.astype(mxu_dtype)
        text_features = text_features.astype(mxu_dtype)
    itemsize = jnp.dtype(image_features.dtype).itemsize

    cap = _vmem_capacity_bytes()
    tb = (_pick_row_strip(b, d, itemsize, int(0.45 * cap))
          if row_strip is None else row_strip)

    # Pad + mask (never fall back to a full [B, B] block for awkward B).
    b_pad = -(-b // tb) * tb
    need_mask = b_pad != b
    if need_mask:
        pad = b_pad - b
        image_features = jnp.pad(image_features, ((0, pad), (0, 0)))
        text_features = jnp.pad(text_features, ((0, pad), (0, 0)))

    # One-time XLA transpose so the kernel contracts ((1,),(0,)) — no per-strip
    # XLU transpose of the resident text block.
    txt_t = text_features.T                               # [D, B_pad]

    grid = (b_pad // tb,)

    # Learned logit_scale may be traced -> (1,) f32 read from SMEM (no recompile).
    logit_scale = jnp.reshape(
        jnp.float32(1.0) / jnp.asarray(temperature, jnp.float32), (1,))

    vmem_limit = int(min(
        0.9 * cap,
        max(1.3 * _vmem_need_bytes(b_pad, d, tb, itemsize) + (8 << 20), 32 << 20)))

    kernel = functools.partial(_clip_loss_kernel,
                               n_valid=b, tb=tb, need_mask=need_mask)

    out = pl.pallas_call(
        kernel,
        out_shape=jax.ShapeDtypeStruct((1, 1), jnp.float32),
        grid_spec=pltpu.PrefetchScalarGridSpec(
            num_scalar_prefetch=0,
            grid=grid,
            in_specs=[
                # logit_scale: whole (1,) array in SMEM.
                pl.BlockSpec(memory_space=pltpu.MemorySpace.SMEM),
                # image row strip: [TB, D] (auto-pipelined / double-buffered).
                pl.BlockSpec((tb, d), lambda i: (i, 0)),
                # text (pre-transposed [D, B_pad]): stays in HBM; copied once
                # into a single-buffered VMEM scratch inside the kernel.
                pl.BlockSpec(memory_space=pl.ANY),
            ],
            out_specs=pl.BlockSpec((1, 1), lambda i: (0, 0)),
            scratch_shapes=[
                pltpu.VMEM((d, b_pad), txt_t.dtype),   # resident text (1 buffer)
                pltpu.VMEM((1, b_pad), jnp.float32),   # m_col: online col-LSE max
                pltpu.VMEM((1, b_pad), jnp.float32),   # l_col: online col-LSE sum
                pltpu.VMEM((1, 1), jnp.float32),       # sum of per-row LSE
                pltpu.VMEM((1, 1), jnp.float32),       # sum of diagonal logits
            ],
        ),
        # Carried reduction across row strips -> "arbitrary".
        compiler_params=pltpu.CompilerParams(
            dimension_semantics=("arbitrary",),
            vmem_limit_bytes=vmem_limit,
        ),
    )(logit_scale, image_features, txt_t)
    return out[0, 0]


def clip_loss_ref(image_features, text_features, temperature):
    """Pure-JAX reference matching the PyTorch forward."""
    scale = 1.0 / float(temperature)
    img = image_features.astype(jnp.float32)
    txt = text_features.astype(jnp.float32)
    lpi = scale * img @ txt.T
    lpt = scale * txt @ img.T
    labels = jnp.arange(img.shape[0])

    def ce(logits):
        logp = jax.nn.log_softmax(logits, axis=-1)
        return -jnp.mean(logp[jnp.arange(logits.shape[0]), labels])

    return 0.5 * (ce(lpi) + ce(lpt))


if __name__ == "__main__":
    key = jax.random.PRNGKey(0)
    k1, k2, k3, k4, k5, k6 = jax.random.split(key, 6)
    temperature = 0.07  # module stores logit_scale = 1/temperature

    def _norm(x):
        return x / jnp.linalg.norm(x, axis=-1, keepdims=True)

    # 1) Small single-strip case (B=8, D=32), strip picked automatically.
    B, D = 8, 32
    img = _norm(jax.random.normal(k1, (B, D), dtype=jnp.float32))
    txt = _norm(jax.random.normal(k2, (B, D), dtype=jnp.float32))
    loss = jax.block_until_ready(clip_loss(img, txt, temperature))
    ref = clip_loss_ref(img, txt, temperature)
    assert jnp.allclose(loss, ref, atol=2e-4, rtol=2e-4), (loss, ref)

    # 2) Multi-strip case exercising the shared-exp online column LSE (4 strips).
    B2, D2 = 32, 128
    img2 = _norm(jax.random.normal(k3, (B2, D2), dtype=jnp.float32))
    txt2 = _norm(jax.random.normal(k4, (B2, D2), dtype=jnp.float32))
    loss2 = jax.block_until_ready(clip_loss(img2, txt2, temperature, row_strip=8))
    ref2 = clip_loss_ref(img2, txt2, temperature)
    assert jnp.allclose(loss2, ref2, atol=2e-4, rtol=2e-4), (loss2, ref2)

    # 3) Non-divisible batch (B=20, strip=8 -> padded to 24) exercising the
    #    pad+mask path that replaced the full-[B,B] fallback.
    B3, D3 = 20, 64
    img3 = _norm(jax.random.normal(k5, (B3, D3), dtype=jnp.float32))
    txt3 = _norm(jax.random.normal(k6, (B3, D3), dtype=jnp.float32))
    loss3 = jax.block_until_ready(clip_loss(img3, txt3, temperature, row_strip=8))
    ref3 = clip_loss_ref(img3, txt3, temperature)
    assert jnp.allclose(loss3, ref3, atol=2e-4, rtol=2e-4), (loss3, ref3)

    print("KERNEL_OK")
</pallas_src>

<mosaic_0001>
module attributes {stable_mosaic.version = 11 : i64} {
  func.func @_clip_loss_kernel(%arg0: i32, %arg1: memref<1xf32, #tpu.memory_space<smem>>, %arg2: memref<8x32xf32, #tpu.memory_space<vmem>>, %arg3: memref<32x8xf32, #tpu.memory_space<any>>, %arg4: memref<1x1xf32, #tpu.memory_space<vmem>>, %arg5: memref<32x8xf32, #tpu.memory_space<vmem>>, %arg6: memref<1x8xf32, #tpu.memory_space<vmem>>, %arg7: memref<1x8xf32, #tpu.memory_space<vmem>>, %arg8: memref<1x1xf32, #tpu.memory_space<vmem>>, %arg9: memref<1x1xf32, #tpu.memory_space<vmem>>) attributes {dimension_semantics = [#tpu.dimension_semantics<arbitrary>], iteration_bounds = array<i64: 1>, scalar_prefetch = 0 : i64, scratch_operands = 5 : i64, tpu.core_type = #tpu.core_type<tc>, window_params = [{transform_indices = @transform_0, window_bounds = array<i64: 1>}, {transform_indices = @transform_1, window_bounds = array<i64: 8, 32>}, {}, {pipeline_mode = #tpu.pipeline_mode<synchronous>, transform_indices = @transform_3, window_bounds = array<i64: 1, 1>}]} {
    %c0_i32 = arith.constant 0 : i32
    %0 = arith.cmpi eq, %arg0, %c0_i32 : i32
    %1 = arith.extui %0 : i1 to i32
    %c0_i32_0 = arith.constant 0 : i32
    %2 = arith.cmpi ne, %1, %c0_i32_0 : i32
    scf.if %2 {
      "tpu.region"() ({
        %69 = tpu.sem_alloc : memref<!tpu.dma_semaphore, #tpu.memory_space<semaphore_mem>>
        tpu.enqueue_dma source(%arg3 : memref<32x8xf32, #tpu.memory_space<any>>) target(%arg5 : memref<32x8xf32, #tpu.memory_space<vmem>>) target_semaphore(%69 : memref<!tpu.dma_semaphore, #tpu.memory_space<semaphore_mem>>)
        tpu.wait_dma2 semaphore(%69 : memref<!tpu.dma_semaphore, #tpu.memory_space<semaphore_mem>>) src(%arg3 : memref<32x8xf32, #tpu.memory_space<any>>) dst(%arg5 : memref<32x8xf32, #tpu.memory_space<vmem>>)
        tpu.yield
      }) : () -> ()
      %cst_33 = arith.constant 0xFF800000 : f32
      %61 = vector.broadcast %cst_33 : f32 to vector<1x8xf32>
      %c0_34 = arith.constant 0 : index
      %c0_35 = arith.constant 0 : index
      %62 = vector.load %arg6[%c0_34, %c0_35] : memref<1x8xf32, #tpu.memory_space<vmem>>, vector<1x8xf32>
      tpu.vector_store %arg6[%c0_34, %c0_35], %61 {strides = array<i32>} : memref<1x8xf32, #tpu.memory_space<vmem>>, vector<1x8xf32>,
      %cst_36 = arith.constant 0.000000e+00 : f32
      %63 = vector.broadcast %cst_36 : f32 to vector<1x8xf32>
      %c0_37 = arith.constant 0 : index
      %c0_38 = arith.constant 0 : index
      %64 = vector.load %arg7[%c0_37, %c0_38] : memref<1x8xf32, #tpu.memory_space<vmem>>, vector<1x8xf32>
      tpu.vector_store %arg7[%c0_37, %c0_38], %63 {strides = array<i32>} : memref<1x8xf32, #tpu.memory_space<vmem>>, vector<1x8xf32>,
      %cst_39 = arith.constant 0.000000e+00 : f32
      %65 = vector.broadcast %cst_39 : f32 to vector<1x1xf32>
      %c0_40 = arith.constant 0 : index
      %c0_41 = arith.constant 0 : index
      %66 = vector.load %arg8[%c0_40, %c0_41] : memref<1x1xf32, #tpu.memory_space<vmem>>, vector<1x1xf32>
      tpu.vector_store %arg8[%c0_40, %c0_41], %65 {strides = array<i32>} : memref<1x1xf32, #tpu.memory_space<vmem>>, vector<1x1xf32>,
      %cst_42 = arith.constant 0.000000e+00 : f32
      %67 = vector.broadcast %cst_42 : f32 to vector<1x1xf32>
      %c0_43 = arith.constant 0 : index
      %c0_44 = arith.constant 0 : index
      %68 = vector.load %arg9[%c0_43, %c0_44] : memref<1x1xf32, #tpu.memory_space<vmem>>, vector<1x1xf32>
      tpu.vector_store %arg9[%c0_43, %c0_44], %67 {strides = array<i32>} : memref<1x1xf32, #tpu.memory_space<vmem>>, vector<1x1xf32>,
    } else {
    }
    %c0 = arith.constant 0 : index
    %3 = memref.load %arg1[%c0] : memref<1xf32, #tpu.memory_space<smem>>
    %c0_1 = arith.constant 0 : index
    %c0_2 = arith.constant 0 : index
    %4 = vector.load %arg2[%c0_1, %c0_2] : memref<8x32xf32, #tpu.memory_space<vmem>>, vector<8x32xf32>
    %c0_3 = arith.constant 0 : index
    %c0_4 = arith.constant 0 : index
    %5 = vector.load %arg5[%c0_3, %c0_4] : memref<32x8xf32, #tpu.memory_space<vmem>>, vector<32x8xf32>
    %cst = arith.constant dense<0.000000e+00> : vector<8x8xf32>
    %6 = tpu.matmul %4, %5, %cst {dimension_numbers = #tpu.dot_dimension_numbers<[1], [0], [0], [1], [0, 0, 1, 1], [], []>} : vector<8x32xf32>, vector<32x8xf32>, vector<8x8xf32> -> vector<8x8xf32>
    %7 = vector.broadcast %3 : f32 to vector<8x8xf32>
    %8 = arith.mulf %6, %7 : vector<8x8xf32>
    %c8_i32 = arith.constant 8 : i32
    %9 = arith.muli %arg0, %c8_i32 : i32
    %10 = tpu.iota {dimensions = array<i32: 0>} : vector<8x8xi32>
    %11 = vector.broadcast %9 : i32 to vector<8x8xi32>
    %12 = arith.addi %11, %10 : vector<8x8xi32>
    %13 = tpu.iota {dimensions = array<i32: 1>} : vector<8x8xi32>
    %14 = arith.cmpi eq, %13, %12 : vector<8x8xi32>
    %cst_5 = arith.constant 0.000000e+00 : f32
    %15 = vector.broadcast %cst_5 : f32 to vector<8x8xf32>
    %16 = arith.select %14, %8, %15 : vector<8x8xi1>, vector<8x8xf32>
    %cst_6 = arith.constant dense<0.000000e+00> : vector<8xf32>
    %17 = vector.multi_reduction <add>, %16, %cst_6 [1] : vector<8x8xf32> to vector<8xf32>
    %18 = vector.shape_cast %17 : vector<8xf32> to vector<8x1xf32>
    %c0_7 = arith.constant 0 : index
    %c0_8 = arith.constant 0 : index
    %19 = vector.load %arg9[%c0_7, %c0_8] : memref<1x1xf32, #tpu.memory_space<vmem>>, vector<1x1xf32>
    %cst_9 = arith.constant dense<0.000000e+00> : vector<1xf32>
    %20 = vector.multi_reduction <add>, %18, %cst_9 [0] : vector<8x1xf32> to vector<1xf32>
    %21 = vector.shape_cast %20 : vector<1xf32> to vector<1x1xf32>
    %22 = arith.addf %19, %21 : vector<1x1xf32>
    %c0_10 = arith.constant 0 : index
    %c0_11 = arith.constant 0 : index
    %23 = vector.load %arg9[%c0_10, %c0_11] : memref<1x1xf32, #tpu.memory_space<vmem>>, vector<1x1xf32>
    tpu.vector_store %arg9[%c0_10, %c0_11], %22 {strides = array<i32>} : memref<1x1xf32, #tpu.memory_space<vmem>>, vector<1x1xf32>,
    %cst_12 = arith.constant dense<0xFF800000> : vector<8xf32>
    %24 = vector.multi_reduction <maximumf>, %8, %cst_12 [1] : vector<8x8xf32> to vector<8xf32>
    %25 = vector.shape_cast %24 : vector<8xf32> to vector<8x1xf32>
    %cst_13 = arith.constant dense<0xFF800000> : vector<1xf32>
    %26 = vector.multi_reduction <maximumf>, %25, %cst_13 [0] : vector<8x1xf32> to vector<1xf32>
    %27 = vector.shape_cast %26 : vector<1xf32> to vector<1x1xf32>
    %28 = vector.broadcast %27 : vector<1x1xf32> to vector<8x8xf32>
    %29 = arith.subf %8, %28 : vector<8x8xf32>
    %30 = math.exp %29 : vector<8x8xf32>
    %cst_14 = arith.constant dense<0.000000e+00> : vector<8xf32>
    %31 = vector.multi_reduction <add>, %30, %cst_14 [1] : vector<8x8xf32> to vector<8xf32>
    %32 = vector.shape_cast %31 : vector<8xf32> to vector<8x1xf32>
    %33 = math.log %32 : vector<8x1xf32>
    %34 = vector.broadcast %27 : vector<1x1xf32> to vector<8x1xf32>
    %35 = arith.addf %33, %34 : vector<8x1xf32>
    %c0_15 = arith.constant 0 : index
    %c0_16 = arith.constant 0 : index
    %36 = vector.load %arg8[%c0_15, %c0_16] : memref<1x1xf32, #tpu.memory_space<vmem>>, vector<1x1xf32>
    %cst_17 = arith.constant dense<0.000000e+00> : vector<1xf32>
    %37 = vector.multi_reduction <add>, %35, %cst_17 [0] : vector<8x1xf32> to vector<1xf32>
    %38 = vector.shape_cast %37 : vector<1xf32> to vector<1x1xf32>
    %39 = arith.addf %36, %38 : vector<1x1xf32>
    %c0_18 = arith.constant 0 : index
    %c0_19 = arith.constant 0 : index
    %40 = vector.load %arg8[%c0_18, %c0_19] : memref<1x1xf32, #tpu.memory_space<vmem>>, vector<1x1xf32>
    tpu.vector_store %arg8[%c0_18, %c0_19], %39 {strides = array<i32>} : memref<1x1xf32, #tpu.memory_space<vmem>>, vector<1x1xf32>,
    %cst_20 = arith.constant dense<0.000000e+00> : vector<8xf32>
    %41 = vector.multi_reduction <add>, %30, %cst_20 [0] : vector<8x8xf32> to vector<8xf32>
    %42 = vector.shape_cast %41 : vector<8xf32> to vector<1x8xf32>
    %c0_21 = arith.constant 0 : index
    %c0_22 = arith.constant 0 : index
    %43 = vector.load %arg6[%c0_21, %c0_22] : memref<1x8xf32, #tpu.memory_space<vmem>>, vector<1x8xf32>
    %44 = vector.broadcast %27 : vector<1x1xf32> to vector<1x8xf32>
    %45 = arith.maximumf %43, %44 : vector<1x8xf32>
    %c0_23 = arith.constant 0 : index
    %c0_24 = arith.constant 0 : index
    %46 = vector.load %arg7[%c0_23, %c0_24] : memref<1x8xf32, #tpu.memory_space<vmem>>, vector<1x8xf32>
    %c0_25 = arith.constant 0 : index
    %c0_26 = arith.constant 0 : index
    %47 = vector.load %arg6[%c0_25, %c0_26] : memref<1x8xf32, #tpu.memory_space<vmem>>, vector<1x8xf32>
    %48 = arith.subf %47, %45 : vector<1x8xf32>
    %49 = math.exp %48 : vector<1x8xf32>
    %50 = arith.mulf %46, %49 : vector<1x8xf32>
    %51 = vector.broadcast %27 : vector<1x1xf32> to vector<1x8xf32>
    %52 = arith.subf %51, %45 : vector<1x8xf32>
    %53 = math.exp %52 : vector<1x8xf32>
    %54 = arith.mulf %42, %53 : vector<1x8xf32>
    %55 = arith.addf %50, %54 : vector<1x8xf32>
    %c0_27 = arith.constant 0 : index
    %c0_28 = arith.constant 0 : index
    %56 = vector.load %arg7[%c0_27, %c0_28] : memref<1x8xf32, #tpu.memory_space<vmem>>, vector<1x8xf32>
    tpu.vector_store %arg7[%c0_27, %c0_28], %55 {strides = array<i32>} : memref<1x8xf32, #tpu.memory_space<vmem>>, vector<1x8xf32>,
    %c0_29 = arith.constant 0 : index
    %c0_30 = arith.constant 0 : index
    %57 = vector.load %arg6[%c0_29, %c0_30] : memref<1x8xf32, #tpu.memory_space<vmem>>, vector<1x8xf32>
    tpu.vector_store %arg6[%c0_29, %c0_30], %45 {strides = array<i32>} : memref<1x8xf32, #tpu.memory_space<vmem>>, vector<1x8xf32>,
    %c0_i32_31 = arith.constant 0 : i32
    %58 = arith.cmpi eq, %arg0, %c0_i32_31 : i32
    %59 = arith.extui %58 : i1 to i32
    %c0_i32_32 = arith.constant 0 : i32
    %60 = arith.cmpi ne, %59, %c0_i32_32 : i32
    scf.if %60 {
      %c0_33 = arith.constant 0 : index
      %c0_34 = arith.constant 0 : index
      %61 = vector.load %arg6[%c0_33, %c0_34] : memref<1x8xf32, #tpu.memory_space<vmem>>, vector<1x8xf32>
      %c0_35 = arith.constant 0 : index
      %c0_36 = arith.constant 0 : index
      %62 = vector.load %arg7[%c0_35, %c0_36] : memref<1x8xf32, #tpu.memory_space<vmem>>, vector<1x8xf32>
      %63 = math.log %62 : vector<1x8xf32>
      %64 = arith.addf %61, %63 : vector<1x8xf32>
      %cst_37 = arith.constant dense<0.000000e+00> : vector<1xf32>
      %65 = vector.multi_reduction <add>, %64, %cst_37 [1] : vector<1x8xf32> to vector<1xf32>
      %66 = vector.shape_cast %65 : vector<1xf32> to vector<1x1xf32>
      %c0_38 = arith.constant 0 : index
      %c0_39 = arith.constant 0 : index
      %67 = vector.load %arg8[%c0_38, %c0_39] : memref<1x1xf32, #tpu.memory_space<vmem>>, vector<1x1xf32>
      %c0_40 = arith.constant 0 : index
      %c0_41 = arith.constant 0 : index
      %68 = vector.load %arg9[%c0_40, %c0_41] : memref<1x1xf32, #tpu.memory_space<vmem>>, vector<1x1xf32>
      %69 = arith.subf %67, %68 : vector<1x1xf32>
      %c0_42 = arith.constant 0 : index
      %c0_43 = arith.constant 0 : index
      %70 = vector.load %arg9[%c0_42, %c0_43] : memref<1x1xf32, #tpu.memory_space<vmem>>, vector<1x1xf32>
      %71 = arith.subf %66, %70 : vector<1x1xf32>
      %72 = arith.addf %69, %71 : vector<1x1xf32>
      %cst_44 = arith.constant 5.000000e-01 : f32
      %73 = vector.broadcast %cst_44 : f32 to vector<1x1xf32>
      %74 = arith.mulf %73, %72 : vector<1x1xf32>
      %cst_45 = arith.constant 1.250000e-01 : f32
      %75 = vector.broadcast %cst_45 : f32 to vector<1x1xf32>
      %76 = arith.mulf %74, %75 : vector<1x1xf32>
      %c0_46 = arith.constant 0 : index
      %c0_47 = arith.constant 0 : index
      %77 = vector.load %arg4[%c0_46, %c0_47] : memref<1x1xf32, #tpu.memory_space<vmem>>, vector<1x1xf32>
      tpu.vector_store %arg4[%c0_46, %c0_47], %76 {strides = array<i32>} : memref<1x1xf32, #tpu.memory_space<vmem>>, vector<1x1xf32>,
    } else {
    }
    return
  }
  func.func @transform_0(%arg0: i32) -> i32 {
    %c0_i32 = arith.constant 0 : i32
    %c0_i32_0 = arith.constant 0 : i32
    return %c0_i32 : i32
  }
  func.func @transform_1(%arg0: i32) -> (i32, i32) {
    %c0_i32 = arith.constant 0 : i32
    %c0_i32_0 = arith.constant 0 : i32
    return %arg0, %c0_i32 : i32, i32
  }
  func.func @transform_3(%arg0: i32) -> (i32, i32) {
    %c0_i32 = arith.constant 0 : i32
    %c0_i32_0 = arith.constant 0 : i32
    %c0_i32_1 = arith.constant 0 : i32
    return %c0_i32, %c0_i32_0 : i32, i32
  }
}

</mosaic_0001>

<llo_original>
// kernel: tpu_custom_call.1
$region0: #{tpu_custom_call.1}
  #allocation0 [shape = 'u32[]', space=smem, size = 0x4, offset = 0x4, fixed_abs, tag = 'smem constant byte address 0x4 - core index']
  #allocation1 [shape = 'u32[144,128]{1,0:T(1,128)}', space=vmem, size = 0x12000, scoped, tag = 'internal scratch']
  #allocation2 [shape = 'f32[32,8]{1,0:T(8,128)}', space=vmem, size = 0x4000, scoped, tag = 'scratch operand']
  #allocation3 [shape = 'f32[1,8]{1,0:T(1,128)}', space=vmem, size = 0x200, scoped, tag = 'scratch operand']
  #allocation4 [shape = 'f32[1,8]{1,0:T(1,128)}', space=vmem, size = 0x200, scoped, tag = 'scratch operand']
  #allocation5 [shape = 'f32[1,1]{1,0:T(1,128)}', space=vmem, size = 0x200, scoped, tag = 'scratch operand']
  #allocation6 [shape = 'f32[1,1]{1,0:T(1,128)}', space=vmem, size = 0x200, scoped, tag = 'scratch operand']
  #allocation7 [shape = 'f32[1]{0:T(128)S(6)}', space=smem, size = 0x200, scoped, tag = 'scoped memory for tpu_custom_call.1']
  #allocation11 [shape = 's32[]', space=sflag, size = 0x4, offset = 0, fixed_abs, tag = 'sflag constant byte address 0x0 - dummy sync flag']
  %s0 = inlined_call_operand.<no memory space> [shape: f32[1], index: 0, kind: input, shape index: {}]
  %s1 = inlined_call_operand.vmem [shape: f32[8,32], index: 1, kind: input, shape index: {}]
  %s2 = inlined_call_operand.vmem [shape: f32[32,8], index: 2, kind: input, shape index: {}]
  %s3 = inlined_call_operand.hbm [shape: f32[1,1], index: 3, kind: output, shape index: {}]
  %s4 = sld [smem:[#allocation0]]
  $region61: #{tpu_custom_call.1} parent=0
    _
  %s6 = ssub.s32 1, %s4
  %s7 = scalar_select 0, %s6, %s4
  %8 = sst [smem:[#allocation7]] %s0
  $region1: #{tpu_custom_call.1} parent=0
    #allocation8 [shape = 'u8[512]{0}', space=vmem, size = 0x400, scoped, tag = 'output window, operand 0, single buffered']
    #allocation9 [shape = 's32[1]{0}', space=sflag, size = 0x4, scoped, tag = 'scoped memory for tpu_custom_call.1']
    %9 = vsyncpa [#allocation9], 0
    // Predicated region
    $region2: #{tpu_custom_call.1} parent=1 // pred_check
      _
    $region3: #{tpu_custom_call.1} parent=1 // pred_check_branch
      %11 = sbr.rel (0) target = $region5
    $region4: #{tpu_custom_call.1} parent=1 // pred_region
      _
    $region5: #{tpu_custom_call.1} parent=1 // pred_fallthru
      _
    // Predicated region
    $region6: #{tpu_custom_call.1} parent=1 // pred_check
      _
    $region7: #{tpu_custom_call.1} parent=1 // pred_check_branch
      %13 = sbr.rel (0) target = $region9
    $region8: #{tpu_custom_call.1} parent=1 // pred_region
      _
    $region9: #{tpu_custom_call.1} parent=1 // pred_fallthru
      _
    %p14 = scmp.eq.s32.totalorder 0, 0
    // Predicated region
    $region10: #{tpu_custom_call.1} parent=1 // pred_check
      %p15 = pneg %p14
    $region11: #{tpu_custom_call.1} parent=1 // pred_check_branch
      %17 = sbr.rel (%p15) target = $region13
    $region12: #{tpu_custom_call.1} parent=1 // pred_region
      $region14: #{tpu_custom_call.1} parent=12
        #allocation10 [shape = 's32[1]{0}', space=sflag, size = 0x4, scoped, tag = 'scoped memory for tpu_custom_call.1']
        %p19 = scmp.lt.u32.totalorder 32, 8
        %p20 = pneg %p19
        // Predicated region
        $region15: #{tpu_custom_call.1} parent=14 // pred_check
          _
        $region16: #{tpu_custom_call.1} parent=14 // pred_check_branch
          %22 = sbr.rel (%p19) target = $region18
        $region17: #{tpu_custom_call.1} parent=14 // pred_region
          %s38 = sand.u32 32, 7
          %p39 = scmp.eq.s32.totalorder %s38, 0
          // Predicated region
          $region30: #{tpu_custom_call.1} parent=17 // pred_check
            %p40 = pneg %p39
          $region31: #{tpu_custom_call.1} parent=17 // pred_check_branch
            %42 = sbr.rel (%p40) target = $region33
          $region32: #{tpu_custom_call.1} parent=17 // pred_region
            loop: start=0, step=1, limit=1
            $region34: #{tpu_custom_call.1} parent=32 // loop_pre_header
              _
            $region35: #{tpu_custom_call.1} parent=32 // loop_header
              %s44 = sphi 0, %s48
              %p45 = scmp.ge.s32.totalorder %s44, 1
              %s49 = sphi %s2, %s2
              %s50 = sphi [#allocation2], [#allocation2]
            $region36: #{tpu_custom_call.1} parent=32 // loop_header_branch
              %47 = sbr.rel (%p45) target = $region40
            $region37: #{tpu_custom_call.1} parent=32 // loop_body
              %v51 = vld [vmem:[%s49] sm:$0xff]
              %52 = vst [vmem:[%s50] sm:$0xff] %v51
              %v53 = vld [vmem:[%s49 + $0x8] sm:$0xff]
              %54 = vst [vmem:[%s50 + $0x8] sm:$0xff] %v53
              %v55 = vld [vmem:[%s49 + $0x10] sm:$0xff]
              %56 = vst [vmem:[%s50 + $0x10] sm:$0xff] %v55
              %v57 = vld [vmem:[%s49 + $0x18] sm:$0xff]
              %58 = vst [vmem:[%s50 + $0x18] sm:$0xff] %v57
            $region38: #{tpu_custom_call.1} parent=32 // loop_footer
              %s48 = sadd.s32 1, %s44
            $region39: #{tpu_custom_call.1} parent=32 // loop_footer_branch
              %43 = sbr.rel target = $region35
            $region40: #{tpu_custom_call.1} parent=32 // loop_exit
              _
          $region33: #{tpu_custom_call.1} parent=17 // pred_fallthru
            _
          %p59 = pneg %p39
          // Predicated region
          $region41: #{tpu_custom_call.1} parent=17 // pred_check
            _
          $region42: #{tpu_custom_call.1} parent=17 // pred_check_branch
            %61 = sbr.rel (%p39) target = $region44
          $region43: #{tpu_custom_call.1} parent=17 // pred_region
            %s62 = sand.u32 32, 7
          $region44: #{tpu_custom_call.1} parent=17 // pred_fallthru
            _
        $region18: #{tpu_custom_call.1} parent=14 // pred_fallthru
          _
        // Predicated region
        $region19: #{tpu_custom_call.1} parent=14 // pred_check
          %p23 = pneg %p19
        $region20: #{tpu_custom_call.1} parent=14 // pred_check_branch
          %25 = sbr.rel (%p23) target = $region22
        $region21: #{tpu_custom_call.1} parent=14 // pred_region
          %s26 = sshll.u32 1, 32
          %s27 = ssub.s32 %s26, 1
          loop: start=0, step=1, limit=1
          $region23: #{tpu_custom_call.1} parent=21 // loop_pre_header
            _
          $region24: #{tpu_custom_call.1} parent=21 // loop_header
            %s29 = sphi 0, %s33
            %p30 = scmp.ge.s32.totalorder %s29, 1
            %s34 = sphi %s2, %s2
            %s35 = sphi [#allocation2], [#allocation2]
          $region25: #{tpu_custom_call.1} parent=21 // loop_header_branch
            %32 = sbr.rel (%p30) target = $region29
          $region26: #{tpu_custom_call.1} parent=21 // loop_body
            %v36 = vld [vmem:[%s34] sm:%s27]
            %37 = vst [vmem:[%s35] sm:%s27] %v36
          $region27: #{tpu_custom_call.1} parent=21 // loop_footer
            %s33 = sadd.s32 1, %s29
          $region28: #{tpu_custom_call.1} parent=21 // loop_footer_branch
            %28 = sbr.rel target = $region24
          $region29: #{tpu_custom_call.1} parent=21 // loop_exit
            _
        $region22: #{tpu_custom_call.1} parent=14 // pred_fallthru
          _
        // Predicated region
        $region45: #{tpu_custom_call.1} parent=14 // pred_check
          _
        $region46: #{tpu_custom_call.1} parent=14 // pred_check_branch
          %65 = sbr.rel (0) target = $region48
        $region47: #{tpu_custom_call.1} parent=14 // pred_region
          %66 = vsyncadd [#allocation10], 512
        $region48: #{tpu_custom_call.1} parent=14 // pred_fallthru
          _
        %s67 = smul.u32 32, 1
        %s68 = sshll.u32 %s67, 4
        %69 = dma.done [#allocation10], %s68
      %vm70 = vcmask 57344
      %71 = vst.msk [vmem:[#allocation3] sm:$0x1] %vm70, -inf
      %72 = vst.msk [vmem:[#allocation4] sm:$0x1] %vm70, 0.0
      %vm73 = vcmask 0
      %74 = vst.msk [vmem:[#allocation5] sm:$0x1] %vm73, 0.0
      %75 = vst.msk [vmem:[#allocation6] sm:$0x1] %vm73, 0.0
    $region13: #{tpu_custom_call.1} parent=1 // pred_fallthru
      _
    %s76 = sld [smem:[#allocation7]]
    %v77 = vld [vmem:[%s1] sm:$0xff]
    %v78 = vld [vmem:[#allocation2] sm:$0xff]
    %v79 = vld [vmem:[#allocation2 + $0x8] sm:$0xff]
    %v80 = vld [vmem:[#allocation2 + $0x10] sm:$0xff]
    %v81 = vld [vmem:[#allocation2 + $0x18] sm:$0xff]
    %vm82 = vcmask 261120
    %v84 = vsel %vm82, %v77, 0
    %86 = vmatprep.subr.mxu0 0.0
    %87 = vmatpush1.msra.mxu0 0.0
    %88 = vmatprep.subr.mxu0 0.0
    %89 = vmatpush1.msra.mxu0 0.0
    %90 = vmatprep.subr.mxu0 0.0
    %91 = vmatpush1.msra.mxu0 0.0
    %92 = vmatprep.subr.mxu0 0.0
    %93 = vmatpush1.msra.mxu0 0.0
    %94 = vmatprep.subr.mxu0 0.0
    %95 = vmatpush1.msra.mxu0 0.0
    %96 = vmatprep.subr.mxu0 0.0
    %97 = vmatpush1.msra.mxu0 0.0
    %98 = vmatprep.subr.mxu0 0.0
    %99 = vmatpush1.msra.mxu0 0.0
    %100 = vmatprep.subr.mxu0 0.0
    %101 = vmatpush1.msra.mxu0 0.0
    %102 = vmatprep.subr.mxu0 0.0
    %103 = vmatpush1.msra.mxu0 0.0
    %104 = vmatprep.subr.mxu0 0.0
    %105 = vmatpush1.msra.mxu0 0.0
    %106 = vmatprep.subr.mxu0 0.0
    %107 = vmatpush1.msra.mxu0 0.0
    %108 = vmatprep.subr.mxu0 0.0
    %109 = vmatpush1.msra.mxu0 0.0
    %110 = vmatprep.subr.mxu0 0.0
    %111 = vmatpush1.msra.mxu0 %v81
    %112 = vmatprep.subr.mxu0 0.0
    %113 = vmatpush1.msra.mxu0 %v80
    %114 = vmatprep.subr.mxu0 0.0
    %115 = vmatpush1.msra.mxu0 %v79
    %116 = vmatprep.subr.mxu0 0.0
    %117 = vmatpush1.msra.mxu0 %v78
    %118 = vmatprep.subr.mxu0 0.0
    %119 = vmatpush2.msra.mxu0 0.0
    %120 = vmatprep.subr.mxu0 0.0
    %121 = vmatpush2.msra.mxu0 0.0
    %122 = vmatprep.subr.mxu0 0.0
    %123 = vmatpush2.msra.mxu0 0.0
    %124 = vmatprep.subr.mxu0 0.0
    %125 = vmatpush2.msra.mxu0 0.0
    %126 = vmatprep.subr.mxu0 0.0
    %127 = vmatpush2.msra.mxu0 0.0
    %128 = vmatprep.subr.mxu0 0.0
    %129 = vmatpush2.msra.mxu0 0.0
    %130 = vmatprep.subr.mxu0 0.0
    %131 = vmatpush2.msra.mxu0 0.0
    %132 = vmatprep.subr.mxu0 0.0
    %133 = vmatpush2.msra.mxu0 0.0
    %134 = vmatprep.subr.mxu0 0.0
    %135 = vmatpush2.msra.mxu0 0.0
    %136 = vmatprep.subr.mxu0 0.0
    %137 = vmatpush2.msra.mxu0 0.0
    %138 = vmatprep.subr.mxu0 0.0
    %139 = vmatpush2.msra.mxu0 0.0
    %140 = vmatprep.subr.mxu0 0.0
    %141 = vmatpush2.msra.mxu0 0.0
    %142 = vmatprep.subr.mxu0 0.0
    %143 = vmatpush2.msra.mxu0 0.0
    %144 = vmatprep.subr.mxu0 0.0
    %145 = vmatpush2.msra.mxu0 0.0
    %146 = vmatprep.subr.mxu0 0.0
    %147 = vmatpush2.msra.mxu0 0.0
    %148 = vmatprep.subr.mxu0 0.0
    %149 = vmatpush2.msra.mxu0 0.0
    %150 = vmatprep.mubr.f32.mxu0 0.0
    %151 = vmatmul.mubr.f32.gmra.mxu0 %v84
    %v152 = vpop.f32.mrf.mxu0
    %v153 = vadd.f32 0.0, %v152
    %v154 = vpop.f32.mrf.mxu0
    %155 = vdwg.mxu0
    %v156 = vstv %s76
    %v157 = vmul.f32 %v153, %v156
    %s158 = smul.u32 0, 8
    %v159 = vlaneseq
    %v160 = vshrl.u32 %v159, 7
    %v161 = vstv %s158
    %v162 = vadd.s32 %v161, %v160
    %v163 = vlaneseq
    %v164 = vand.u32 %v163, 127
    %vm165 = vcmp.eq.s32.totalorder %v164, %v162
    %v166 = vsel %vm165, %v157, 0.0
    %vm167 = vcmask 64512
    %v168 = vsel %vm167, %v166, 0.0
    %169 = vadd.xlane.f32.xlu0 %v168
    %v170 = vpop.xlane.xlu0 %169
    %v171 = vld [vmem:[#allocation6] sm:$0x1]
    %v172 = vrot.slane %v170, 4
    %v173 = vadd.f32 %v170, %v172
    %v174 = vrot.slane %v173, 2
    %v175 = vadd.f32 %v173, %v174
    %v176 = vrot.slane %v175, 1
    %v177 = vadd.f32 %v175, %v176
    %v178 = vadd.f32 %v171, %v177
    %vm179 = vcmask 0
    %180 = vst.msk [vmem:[#allocation6] sm:$0x1] %vm179, %v178
    %v181 = vsel %vm167, %v157, -inf
    %182 = vmax.xlane.f32.xlu0 %v181
    %v183 = vpop.xlane.xlu0 %182
    %v184 = vrot.slane %v183, 4
    %v185 = vmax.f32 %v183, %v184
    %v186 = vrot.slane %v185, 2
    %v187 = vmax.f32 %v185, %v186
    %v188 = vrot.slane %v187, 1
    %v189 = vmax.f32 %v187, %v188
    %v190 = vsub.f32 %v157, %v189
    %v191 = vmul.f32 %v190, 1.442695
    %v192 = vpow.pop %v191
    %v193 = vsel %vm167, %v192, 0.0
    %194 = vadd.xlane.f32.xlu0 %v193
    %v195 = vpop.xlane.xlu0 %194
    %v196 = vlog2.pop %v195
    %v197 = vmul.f32 %v196, 0.6931472
    %v198 = vadd.f32 %v197, %v189
    %v199 = vld [vmem:[#allocation5] sm:$0x1]
    %v200 = vrot.slane %v198, 4
    %v201 = vadd.f32 %v198, %v200
    %v202 = vrot.slane %v201, 2
    %v203 = vadd.f32 %v201, %v202
    %v204 = vrot.slane %v203, 1
    %v205 = vadd.f32 %v203, %v204
    %v206 = vadd.f32 %v199, %v205
    %207 = vst.msk [vmem:[#allocation5] sm:$0x1] %vm179, %v206
    %v208 = vrot.slane %v193, 4
    %v209 = vadd.f32 %v193, %v208
    %v210 = vrot.slane %v209, 2
    %v211 = vadd.f32 %v209, %v210
    %v212 = vrot.slane %v211, 1
    %v213 = vadd.f32 %v211, %v212
    %v214 = vld [vmem:[#allocation3] sm:$0x1]
    %v215 = vmax.f32 %v214, %v189
    %v216 = vld [vmem:[#allocation4] sm:$0x1]
    %v217 = vsub.f32 %v214, %v215
    %v218 = vmul.f32 %v217, 1.442695
    %v219 = vpow.pop %v218
    %v220 = vmul.f32 %v216, %v219
    %v221 = vsub.f32 %v189, %v215
    %v222 = vmul.f32 %v221, 1.442695
    %v223 = vpow.pop %v222
    %v224 = vmul.f32 %v213, %v223
    %v225 = vadd.f32 %v220, %v224
    %vm226 = vcmask 57344
    %227 = vst.msk [vmem:[#allocation4] sm:$0x1] %vm226, %v225
    %228 = vst.msk [vmem:[#allocation3] sm:$0x1] %vm226, %v215
    // Predicated region
    $region49: #{tpu_custom_call.1} parent=1 // pred_check
      %p229 = pneg %p14
    $region50: #{tpu_custom_call.1} parent=1 // pred_check_branch
      %231 = sbr.rel (%p229) target = $region52
    $region51: #{tpu_custom_call.1} parent=1 // pred_region
      %v232 = vld [vmem:[#allocation3] sm:$0x1]
      %v233 = vld [vmem:[#allocation4] sm:$0x1]
      %v234 = vlog2.pop %v233
      %v235 = vmul.f32 %v234, 0.6931472
      %v236 = vadd.f32 %v232, %v235
      %v237 = vsel %vm226, %v236, 0.0
      %238 = vadd.xlane.f32.xlu0 %v237
      %v239 = vpop.xlane.xlu0 %238
      %v240 = vld [vmem:[#allocation5] sm:$0x1]
      %v241 = vld [vmem:[#allocation6] sm:$0x1]
      %v242 = vsub.f32 %v240, %v241
      %v243 = vsub.f32 %v239, %v241
      %v244 = vadd.f32 %v242, %v243
      %v245 = vmul.f32 %v244, 0.5
      %v246 = vmul.f32 %v245, 0.125
      %247 = vst.msk [vmem:[#allocation8] sm:$0x1] %vm179, %v246
    $region52: #{tpu_custom_call.1} parent=1 // pred_fallthru
      _
    // Predicated region
    $region53: #{tpu_custom_call.1} parent=1 // pred_check
      _
    $region54: #{tpu_custom_call.1} parent=1 // pred_check_branch
      %249 = sbr.rel (0) target = $region56
    $region55: #{tpu_custom_call.1} parent=1 // pred_region
      %s251 = ssub.s32 16, 16
      %252 = vsyncadd [#allocation9], %s251
      %s254 = sshll.u32 [#allocation8], 4
      %s255 = int_to_ptr.vmem [resolvable:$true] %s254
      %257 = dma.vmem_to_hbm [thread:$0]  %s255, 16, %s3, [#allocation9]
    $region56: #{tpu_custom_call.1} parent=1 // pred_fallthru
      _
    // Predicated region
    $region57: #{tpu_custom_call.1} parent=1 // pred_check
      _
    $region58: #{tpu_custom_call.1} parent=1 // pred_check_branch
      %259 = sbr.rel (0) target = $region60
    $region59: #{tpu_custom_call.1} parent=1 // pred_region
      %260 = dma.done [#allocation9], 16
    $region60: #{tpu_custom_call.1} parent=1 // pred_fallthru
      _
    %261 = vsyncpa [#allocation9], 1

</llo_original>
